<compile_context>
chip_gen: v5e
topology: v5e:2x2
jax: 0.10.0
libtpu: 0.0.40
codegen_flags: <defaults>
</compile_context>

<pallas_src>
import math

import jax
import jax.numpy as jnp
from jax.experimental import pallas as pl
from jax.experimental.pallas import tpu as pltpu


CONFIG = {
    'input_embedding': {'type': 'peaks', 'n_peaks': 63},   # input_size = 64
    'convolutional': {
        'channels_conv_1': 4,
        'channels_conv_2': 8,
        'channels_conv_3': 8,   # == channels_conv_2 so the module's fc1 sizing is consistent
        'kernel_size_1': [2, 5],
        'kernel_size_2': [1, 3],
        'kernel_size_3': [1, 3],
        'stride_1': 1,
        'stride_2': 1,
        'stride_3': 1,
        'lin_layer_1': 32,
        'lin_layer_2': 16,
    },
}


def _round_up(a, m):
    return ((a + m - 1) // m) * m


def calculate_fc1_size(len_input, k1w, s1, k2w, s2, k3w, s3):
    o1 = (len_input - k1w) / s1 + 1
    o2 = math.floor(o1) / 2
    o3 = (math.floor(o2) - k2w) / s2 + 1
    o4 = math.floor(o3) / 2
    o5 = (math.floor(o4) - k3w) / s3 + 1
    return int(math.floor(o5) / 2)


def init_params(key, config, input_size):
    """Deterministic synthetic params with the same shapes as the nn.Module."""
    cv = config['convolutional']
    c1, c2, c3 = cv['channels_conv_1'], cv['channels_conv_2'], cv['channels_conv_3']
    (k1h, k1w), (k2h, k2w), (k3h, k3w) = (cv['kernel_size_1'], cv['kernel_size_2'],
                                          cv['kernel_size_3'])
    l1, l2 = cv['lin_layer_1'], cv['lin_layer_2']
    fc1_in = c2 * calculate_fc1_size(input_size, k1w, cv['stride_1'],
                                     k2w, cv['stride_2'], k3w, cv['stride_3'])

    keys = jax.random.split(key, 12)

    def uni(k, shape, fan_in):
        bound = 1.0 / math.sqrt(fan_in)
        return jax.random.uniform(k, shape, jnp.float32, minval=-bound, maxval=bound)

    return {
        'conv1_w': uni(keys[0], (c1, 1, k1h, k1w), 1 * k1h * k1w),
        'conv1_b': uni(keys[1], (c1,), 1 * k1h * k1w),
        'conv2_w': uni(keys[2], (c2, c1, k2h, k2w), c1 * k2h * k2w),
        'conv2_b': uni(keys[3], (c2,), c1 * k2h * k2w),
        'conv3_w': uni(keys[4], (c3, c2, k3h, k3w), c2 * k3h * k3w),
        'conv3_b': uni(keys[5], (c3,), c2 * k3h * k3w),
        'fc1_w': uni(keys[6], (l1, fc1_in), fc1_in),
        'fc1_b': uni(keys[7], (l1,), fc1_in),
        'fc2_w': uni(keys[8], (l2, l1), l1),
        'fc2_b': uni(keys[9], (l2,), l1),
        'fc3_w': uni(keys[10], (3, l2), l2),
        'fc3_b': uni(keys[11], (3,), l2),
    }


def fold_conv_relu_pool(w, b, in_rows, pool_w, stride, col_fn):
    """Fold conv(stride) + ReLU + max_pool(1,2) into one matrix.

    Returns (A, bias_col) with A: (2*Cout*P, in_rows) f32, bias_col: (Cout*P, 1) f32.
    Rows [0, Cout*P) are the even pooling taps (w_out = 2p), rows [Cout*P, 2*Cout*P)
    the odd taps (w_out = 2p+1); within a half, row = co*P + p.  The kernel computes
        relu(max(raw[:half], raw[half:]) + bias)
    which equals max_pool(relu(conv(x)+bias)) because the bias is identical for the
    even/odd halves and ReLU/bias commute with max.
    col_fn(ci, kh, off) maps a conv tap to the flattened input-row index.
    """
    cout, cin, khn, kwn = w.shape
    P = pool_w
    shape = (2, cout, P, cin, khn, kwn)
    half = jnp.arange(2).reshape(2, 1, 1, 1, 1, 1)
    co = jnp.arange(cout).reshape(1, cout, 1, 1, 1, 1)
    p = jnp.arange(P).reshape(1, 1, P, 1, 1, 1)
    ci = jnp.arange(cin).reshape(1, 1, 1, cin, 1, 1)
    kh = jnp.arange(khn).reshape(1, 1, 1, 1, khn, 1)
    kw = jnp.arange(kwn).reshape(1, 1, 1, 1, 1, kwn)
    rows = jnp.broadcast_to(half * (cout * P) + co * P + p, shape).reshape(-1)
    cols = jnp.broadcast_to(col_fn(ci, kh, (2 * p + half) * stride + kw),
                            shape).reshape(-1)
    vals = jnp.broadcast_to(w[None, :, None, :, :, :], shape).reshape(-1)
    mat = jnp.zeros((2 * cout * P, in_rows), jnp.float32).at[rows, cols].set(vals)
    bias = jnp.broadcast_to(b[:, None], (cout, P)).reshape(-1, 1)
    return mat, bias.astype(jnp.float32)


def prepare_params(params, config, input_size):
    """One-time fold of the conv/pool layers into dense matmul operands (bf16 weights).

    Call once; reuse the returned dict for every forward call (keeps the scatter /
    broadcast glue out of the hot path).
    """
    cv = config['convolutional']
    c1, c2, c3 = cv['channels_conv_1'], cv['channels_conv_2'], cv['channels_conv_3']
    (k1h, k1w), (k2h, k2w), (k3h, k3w) = (cv['kernel_size_1'], cv['kernel_size_2'],
                                          cv['kernel_size_3'])
    s1, s2, s3 = cv['stride_1'], cv['stride_2'], cv['stride_3']
    W, H = input_size, 2
    # Height must collapse to 1 after conv1 (as in the module's intended use).
    assert (H - k1h) // s1 + 1 == 1 and k2h == 1 and k3h == 1

    w1c = (W - k1w) // s1 + 1
    p1 = w1c // 2
    w2c = (p1 - k2w) // s2 + 1
    p2 = w2c // 2
    w3c = (p2 - k3w) // s3 + 1
    p3 = w3c // 2
    assert c3 * p3 == params['fc1_w'].shape[1], "channels_conv_3 must equal channels_conv_2"

    a1, bb1 = fold_conv_relu_pool(params['conv1_w'], params['conv1_b'], H * W, p1, s1,
                                  lambda ci, kh, off: kh * W + off)
    a2, bb2 = fold_conv_relu_pool(params['conv2_w'], params['conv2_b'], c1 * p1, p2, s2,
                                  lambda ci, kh, off: ci * p1 + off)
    a3, bb3 = fold_conv_relu_pool(params['conv3_w'], params['conv3_b'], c2 * p2, p3, s3,
                                  lambda ci, kh, off: ci * p2 + off)
    bf16 = jnp.bfloat16
    return {
        'a1': a1.astype(bf16), 'b1': bb1,
        'a2': a2.astype(bf16), 'b2': bb2,
        'a3': a3.astype(bf16), 'b3': bb3,
        'f1': params['fc1_w'].astype(bf16), 'g1': params['fc1_b'].astype(jnp.float32)[:, None],
        'f2': params['fc2_w'].astype(bf16), 'g2': params['fc2_b'].astype(jnp.float32)[:, None],
        'f3': params['fc3_w'].astype(bf16), 'g3': params['fc3_b'].astype(jnp.float32)[:, None],
    }


def convolutional_network_forward(x, prep, tb=None):
    """x: (B, 2, W) float32, prep: prepare_params(...) output -> (B, 3) float32."""
    B = x.shape[0]
    a1, b1 = prep['a1'], prep['b1']
    a2, b2 = prep['a2'], prep['b2']
    a3, b3 = prep['a3'], prep['b3']
    f1, g1 = prep['f1'], prep['g1']
    f2, g2 = prep['f2'], prep['g2']
    f3, g3 = prep['f3'], prep['g3']
    two_w = a1.shape[1]
    half1, half2, half3 = a1.shape[0] // 2, a2.shape[0] // 2, a3.shape[0] // 2
    assert x.shape[1] * x.shape[2] == two_w

    # Batch tile (samples land on the lane axis inside the kernel).
    if tb is None:
        tb = min(2048, _round_up(B, 128))
        if B > 256:   # keep >= 2 grid steps so v7x megacore has work for both TCs
            tb = min(tb, max(128, _round_up((B + 1) // 2, 128)))
    assert tb % 128 == 0
    n_steps = -(-B // tb)

    # Natural contiguous view: no HBM repack, no pad (ragged last tile relies on
    # Pallas partial-block handling; garbage columns are sliced off below).
    xf = x.reshape(B, two_w).astype(jnp.float32)

    def kernel(x_ref, a1_ref, b1_ref, a2_ref, b2_ref, a3_ref, b3_ref,
               f1_ref, g1_ref, f2_ref, g2_ref, f3_ref, g3_ref, out_ref):

        def pool_bias_relu(raw, b_ref, half):
            # max over even/odd pooling taps first, then one bias add + ReLU
            m = jnp.maximum(raw[:half, :], raw[half:, :])
            return jnp.maximum(m + b_ref[...], 0.0)

        def mm(w_ref, h):  # bf16 MXU matmul, f32 accumulation
            return jnp.dot(w_ref[...], h.astype(jnp.bfloat16),
                           preferred_element_type=jnp.float32)

        # Layer 1: contract the shared last dim of (2*half1, 2W) and (tb, 2W);
        # result lands directly as (2*half1, tb) with the batch on lanes.
        xb = x_ref[...].astype(jnp.bfloat16)
        raw = jax.lax.dot_general(a1_ref[...], xb, (((1,), (1,)), ((), ())),
                                  preferred_element_type=jnp.float32)
        h = pool_bias_relu(raw, b1_ref, half1)              # (half1, tb) f32
        h = pool_bias_relu(mm(a2_ref, h), b2_ref, half2)    # (half2, tb)
        h = pool_bias_relu(mm(a3_ref, h), b3_ref, half3)    # (half3, tb), torch flatten order
        z = jnp.maximum(mm(f1_ref, h) + g1_ref[...], 0.0)   # (L1, tb)
        z = jnp.maximum(mm(f2_ref, z) + g2_ref[...], 0.0)   # (L2, tb)
        out_ref[...] = mm(f3_ref, z) + g3_ref[...]          # (3, tb) lane-dense

    whole = pl.BlockSpec(memory_space=pltpu.MemorySpace.VMEM)   # weights resident in VMEM
    out = pl.pallas_call(
        kernel,
        out_shape=jax.ShapeDtypeStruct((3, n_steps * tb), jnp.float32),
        grid=(n_steps,),
        in_specs=[pl.BlockSpec((tb, two_w), lambda i: (i, 0))] + [whole] * 12,
        out_specs=pl.BlockSpec((3, tb), lambda i: (0, i)),
        compiler_params=pltpu.CompilerParams(
            dimension_semantics=("parallel",),
            vmem_limit_bytes=32 * 1024 * 1024),
    )(xf, a1, b1, a2, b2, a3, b3, f1, g1, f2, g2, f3, g3)
    return jnp.transpose(out[:, :B])                             # (B, 3)


def reference_forward(x, params, config):
    """Pure-JAX f32 reference reproducing the PyTorch forward (NCHW)."""
    cv = config['convolutional']
    s1, s2, s3 = cv['stride_1'], cv['stride_2'], cv['stride_3']

    def conv(h, w, b, s):
        y = jax.lax.conv_general_dilated(
            h, w, window_strides=(s, s), padding='VALID',
            dimension_numbers=('NCHW', 'OIHW', 'NCHW'))
        return y + b[None, :, None, None]

    def pool(h):
        return jax.lax.reduce_window(h, jnp.array(-jnp.inf, h.dtype), jax.lax.max,
                                     (1, 1, 1, 2), (1, 1, 1, 2), 'VALID')

    h = x[:, None, :, :]
    h = pool(jax.nn.relu(conv(h, params['conv1_w'], params['conv1_b'], s1)))
    h = pool(jax.nn.relu(conv(h, params['conv2_w'], params['conv2_b'], s2)))
    h = pool(jax.nn.relu(conv(h, params['conv3_w'], params['conv3_b'], s3)))
    hf = h.reshape(h.shape[0], -1)
    z = jax.nn.relu(hf @ params['fc1_w'].T + params['fc1_b'])
    z = jax.nn.relu(z @ params['fc2_w'].T + params['fc2_b'])
    return z @ params['fc3_w'].T + params['fc3_b']


if __name__ == "__main__":
    config = CONFIG
    input_size = config['input_embedding']['n_peaks'] + 1   # 64

    key = jax.random.PRNGKey(0)
    k_x, k_x2, k_p = jax.random.split(key, 3)
    params = init_params(k_p, config, input_size)
    prep = prepare_params(params, config, input_size)       # hoisted, one-time fold

    fwd = jax.jit(convolutional_network_forward)

    # Small batch (single, partial batch tile).
    x = jax.random.normal(k_x, (2, 2, input_size), jnp.float32)
    out = jax.block_until_ready(fwd(x, prep))
    assert out.shape == (2, 3)
    ref = reference_forward(x, params, config)
    assert bool(jnp.allclose(out, ref, atol=2e-2, rtol=2e-2)), (out, ref)

    # Larger batch: multi-step grid + ragged last tile (no wrapper pad).
    x2 = jax.random.normal(k_x2, (300, 2, input_size), jnp.float32)
    out2 = jax.block_until_ready(fwd(x2, prep))
    assert out2.shape == (300, 3)
    ref2 = reference_forward(x2, params, config)
    assert bool(jnp.allclose(out2, ref2, atol=2e-2, rtol=2e-2))

    print("KERNEL_OK")
</pallas_src>

<mosaic_0001>
module attributes {stable_mosaic.version = 11 : i64} {
  func.func @kernel(%arg0: i32, %arg1: memref<128x128xf32, #tpu.memory_space<vmem>>, %arg2: memref<240x128xbf16, #tpu.memory_space<vmem>>, %arg3: memref<120x1xf32, #tpu.memory_space<vmem>>, %arg4: memref<224x120xbf16, #tpu.memory_space<vmem>>, %arg5: memref<112x1xf32, #tpu.memory_space<vmem>>, %arg6: memref<96x112xbf16, #tpu.memory_space<vmem>>, %arg7: memref<48x1xf32, #tpu.memory_space<vmem>>, %arg8: memref<32x48xbf16, #tpu.memory_space<vmem>>, %arg9: memref<32x1xf32, #tpu.memory_space<vmem>>, %arg10: memref<16x32xbf16, #tpu.memory_space<vmem>>, %arg11: memref<16x1xf32, #tpu.memory_space<vmem>>, %arg12: memref<3x16xbf16, #tpu.memory_space<vmem>>, %arg13: memref<3x1xf32, #tpu.memory_space<vmem>>, %arg14: memref<3x128xf32, #tpu.memory_space<vmem>>) attributes {dimension_semantics = [#tpu.dimension_semantics<parallel>], iteration_bounds = array<i64: 1>, scalar_prefetch = 0 : i64, scratch_operands = 0 : i64, tpu.core_type = #tpu.core_type<tc>, window_params = [{transform_indices = @transform_0, window_bounds = array<i64: 128, 128>}, {pipeline_mode = #tpu.pipeline_mode<synchronous>, transform_indices = @transform_1, window_bounds = array<i64: 240, 128>}, {pipeline_mode = #tpu.pipeline_mode<synchronous>, transform_indices = @transform_2, window_bounds = array<i64: 120, 1>}, {pipeline_mode = #tpu.pipeline_mode<synchronous>, transform_indices = @transform_3, window_bounds = array<i64: 224, 120>}, {pipeline_mode = #tpu.pipeline_mode<synchronous>, transform_indices = @transform_4, window_bounds = array<i64: 112, 1>}, {pipeline_mode = #tpu.pipeline_mode<synchronous>, transform_indices = @transform_5, window_bounds = array<i64: 96, 112>}, {pipeline_mode = #tpu.pipeline_mode<synchronous>, transform_indices = @transform_6, window_bounds = array<i64: 48, 1>}, {pipeline_mode = #tpu.pipeline_mode<synchronous>, transform_indices = @transform_7, window_bounds = array<i64: 32, 48>}, {pipeline_mode = #tpu.pipeline_mode<synchronous>, transform_indices = @transform_8, window_bounds = array<i64: 32, 1>}, {pipeline_mode = #tpu.pipeline_mode<synchronous>, transform_indices = @transform_9, window_bounds = array<i64: 16, 32>}, {pipeline_mode = #tpu.pipeline_mode<synchronous>, transform_indices = @transform_10, window_bounds = array<i64: 16, 1>}, {pipeline_mode = #tpu.pipeline_mode<synchronous>, transform_indices = @transform_11, window_bounds = array<i64: 3, 16>}, {pipeline_mode = #tpu.pipeline_mode<synchronous>, transform_indices = @transform_12, window_bounds = array<i64: 3, 1>}, {transform_indices = @transform_13, window_bounds = array<i64: 3, 128>}]} {
    %c0 = arith.constant 0 : index
    %c0_0 = arith.constant 0 : index
    %0 = vector.load %arg1[%c0, %c0_0] : memref<128x128xf32, #tpu.memory_space<vmem>>, vector<128x128xf32>
    %1 = arith.truncf %0 : vector<128x128xf32> to vector<128x128xbf16>
    %c0_1 = arith.constant 0 : index
    %c0_2 = arith.constant 0 : index
    %2 = vector.load %arg2[%c0_1, %c0_2] : memref<240x128xbf16, #tpu.memory_space<vmem>>, vector<240x128xbf16>
    %cst = arith.constant dense<0.000000e+00> : vector<240x128xf32>
    %3 = tpu.matmul %2, %1, %cst {dimension_numbers = #tpu.dot_dimension_numbers<[1], [1], [0], [0], [0, 0, 1, 0], [], []>} : vector<240x128xbf16>, vector<128x128xbf16>, vector<240x128xf32> -> vector<240x128xf32>
    %4 = vector.extract_strided_slice %3 {offsets = [0, 0], sizes = [120, 128], strides = [1, 1]} : vector<240x128xf32> to vector<120x128xf32>
    %5 = vector.extract_strided_slice %3 {offsets = [120, 0], sizes = [120, 128], strides = [1, 1]} : vector<240x128xf32> to vector<120x128xf32>
    %6 = arith.maximumf %4, %5 : vector<120x128xf32>
    %c0_3 = arith.constant 0 : index
    %c0_4 = arith.constant 0 : index
    %7 = vector.load %arg3[%c0_3, %c0_4] : memref<120x1xf32, #tpu.memory_space<vmem>>, vector<120x1xf32>
    %8 = vector.broadcast %7 : vector<120x1xf32> to vector<120x128xf32>
    %9 = arith.addf %6, %8 : vector<120x128xf32>
    %cst_5 = arith.constant 0.000000e+00 : f32
    %10 = vector.broadcast %cst_5 : f32 to vector<120x128xf32>
    %11 = arith.maximumf %9, %10 : vector<120x128xf32>
    %c0_6 = arith.constant 0 : index
    %c0_7 = arith.constant 0 : index
    %12 = vector.load %arg4[%c0_6, %c0_7] : memref<224x120xbf16, #tpu.memory_space<vmem>>, vector<224x120xbf16>
    %13 = arith.truncf %11 : vector<120x128xf32> to vector<120x128xbf16>
    %cst_8 = arith.constant dense<0.000000e+00> : vector<224x128xf32>
    %14 = tpu.matmul %12, %13, %cst_8 {dimension_numbers = #tpu.dot_dimension_numbers<[1], [0], [0], [1], [0, 0, 1, 1], [], []>} : vector<224x120xbf16>, vector<120x128xbf16>, vector<224x128xf32> -> vector<224x128xf32>
    %15 = vector.extract_strided_slice %14 {offsets = [0, 0], sizes = [112, 128], strides = [1, 1]} : vector<224x128xf32> to vector<112x128xf32>
    %16 = vector.extract_strided_slice %14 {offsets = [112, 0], sizes = [112, 128], strides = [1, 1]} : vector<224x128xf32> to vector<112x128xf32>
    %17 = arith.maximumf %15, %16 : vector<112x128xf32>
    %c0_9 = arith.constant 0 : index
    %c0_10 = arith.constant 0 : index
    %18 = vector.load %arg5[%c0_9, %c0_10] : memref<112x1xf32, #tpu.memory_space<vmem>>, vector<112x1xf32>
    %19 = vector.broadcast %18 : vector<112x1xf32> to vector<112x128xf32>
    %20 = arith.addf %17, %19 : vector<112x128xf32>
    %cst_11 = arith.constant 0.000000e+00 : f32
    %21 = vector.broadcast %cst_11 : f32 to vector<112x128xf32>
    %22 = arith.maximumf %20, %21 : vector<112x128xf32>
    %c0_12 = arith.constant 0 : index
    %c0_13 = arith.constant 0 : index
    %23 = vector.load %arg6[%c0_12, %c0_13] : memref<96x112xbf16, #tpu.memory_space<vmem>>, vector<96x112xbf16>
    %24 = arith.truncf %22 : vector<112x128xf32> to vector<112x128xbf16>
    %cst_14 = arith.constant dense<0.000000e+00> : vector<96x128xf32>
    %25 = tpu.matmul %23, %24, %cst_14 {dimension_numbers = #tpu.dot_dimension_numbers<[1], [0], [0], [1], [0, 0, 1, 1], [], []>} : vector<96x112xbf16>, vector<112x128xbf16>, vector<96x128xf32> -> vector<96x128xf32>
    %26 = vector.extract_strided_slice %25 {offsets = [0, 0], sizes = [48, 128], strides = [1, 1]} : vector<96x128xf32> to vector<48x128xf32>
    %27 = vector.extract_strided_slice %25 {offsets = [48, 0], sizes = [48, 128], strides = [1, 1]} : vector<96x128xf32> to vector<48x128xf32>
    %28 = arith.maximumf %26, %27 : vector<48x128xf32>
    %c0_15 = arith.constant 0 : index
    %c0_16 = arith.constant 0 : index
    %29 = vector.load %arg7[%c0_15, %c0_16] : memref<48x1xf32, #tpu.memory_space<vmem>>, vector<48x1xf32>
    %30 = vector.broadcast %29 : vector<48x1xf32> to vector<48x128xf32>
    %31 = arith.addf %28, %30 : vector<48x128xf32>
    %cst_17 = arith.constant 0.000000e+00 : f32
    %32 = vector.broadcast %cst_17 : f32 to vector<48x128xf32>
    %33 = arith.maximumf %31, %32 : vector<48x128xf32>
    %c0_18 = arith.constant 0 : index
    %c0_19 = arith.constant 0 : index
    %34 = vector.load %arg8[%c0_18, %c0_19] : memref<32x48xbf16, #tpu.memory_space<vmem>>, vector<32x48xbf16>
    %35 = arith.truncf %33 : vector<48x128xf32> to vector<48x128xbf16>
    %cst_20 = arith.constant dense<0.000000e+00> : vector<32x128xf32>
    %36 = tpu.matmul %34, %35, %cst_20 {dimension_numbers = #tpu.dot_dimension_numbers<[1], [0], [0], [1], [0, 0, 1, 1], [], []>} : vector<32x48xbf16>, vector<48x128xbf16>, vector<32x128xf32> -> vector<32x128xf32>
    %c0_21 = arith.constant 0 : index
    %c0_22 = arith.constant 0 : index
    %37 = vector.load %arg9[%c0_21, %c0_22] : memref<32x1xf32, #tpu.memory_space<vmem>>, vector<32x1xf32>
    %38 = vector.broadcast %37 : vector<32x1xf32> to vector<32x128xf32>
    %39 = arith.addf %36, %38 : vector<32x128xf32>
    %cst_23 = arith.constant 0.000000e+00 : f32
    %40 = vector.broadcast %cst_23 : f32 to vector<32x128xf32>
    %41 = arith.maximumf %39, %40 : vector<32x128xf32>
    %c0_24 = arith.constant 0 : index
    %c0_25 = arith.constant 0 : index
    %42 = vector.load %arg10[%c0_24, %c0_25] : memref<16x32xbf16, #tpu.memory_space<vmem>>, vector<16x32xbf16>
    %43 = arith.truncf %41 : vector<32x128xf32> to vector<32x128xbf16>
    %cst_26 = arith.constant dense<0.000000e+00> : vector<16x128xf32>
    %44 = tpu.matmul %42, %43, %cst_26 {dimension_numbers = #tpu.dot_dimension_numbers<[1], [0], [0], [1], [0, 0, 1, 1], [], []>} : vector<16x32xbf16>, vector<32x128xbf16>, vector<16x128xf32> -> vector<16x128xf32>
    %c0_27 = arith.constant 0 : index
    %c0_28 = arith.constant 0 : index
    %45 = vector.load %arg11[%c0_27, %c0_28] : memref<16x1xf32, #tpu.memory_space<vmem>>, vector<16x1xf32>
    %46 = vector.broadcast %45 : vector<16x1xf32> to vector<16x128xf32>
    %47 = arith.addf %44, %46 : vector<16x128xf32>
    %cst_29 = arith.constant 0.000000e+00 : f32
    %48 = vector.broadcast %cst_29 : f32 to vector<16x128xf32>
    %49 = arith.maximumf %47, %48 : vector<16x128xf32>
    %c0_30 = arith.constant 0 : index
    %c0_31 = arith.constant 0 : index
    %50 = vector.load %arg12[%c0_30, %c0_31] : memref<3x16xbf16, #tpu.memory_space<vmem>>, vector<3x16xbf16>
    %51 = arith.truncf %49 : vector<16x128xf32> to vector<16x128xbf16>
    %cst_32 = arith.constant dense<0.000000e+00> : vector<3x128xf32>
    %52 = tpu.matmul %50, %51, %cst_32 {dimension_numbers = #tpu.dot_dimension_numbers<[1], [0], [0], [1], [0, 0, 1, 1], [], []>} : vector<3x16xbf16>, vector<16x128xbf16>, vector<3x128xf32> -> vector<3x128xf32>
    %c0_33 = arith.constant 0 : index
    %c0_34 = arith.constant 0 : index
    %53 = vector.load %arg13[%c0_33, %c0_34] : memref<3x1xf32, #tpu.memory_space<vmem>>, vector<3x1xf32>
    %54 = vector.broadcast %53 : vector<3x1xf32> to vector<3x128xf32>
    %55 = arith.addf %52, %54 : vector<3x128xf32>
    %c0_35 = arith.constant 0 : index
    %c0_36 = arith.constant 0 : index
    %56 = vector.load %arg14[%c0_35, %c0_36] : memref<3x128xf32, #tpu.memory_space<vmem>>, vector<3x128xf32>
    tpu.vector_store %arg14[%c0_35, %c0_36], %55 {strides = array<i32>} : memref<3x128xf32, #tpu.memory_space<vmem>>, vector<3x128xf32>,
    return
  }
  func.func @transform_0(%arg0: i32) -> (i32, i32) {
    %c0_i32 = arith.constant 0 : i32
    %c0_i32_0 = arith.constant 0 : i32
    return %arg0, %c0_i32 : i32, i32
  }
  func.func @transform_1(%arg0: i32) -> (i32, i32) {
    %c0_i32 = arith.constant 0 : i32
    %c0_i32_0 = arith.constant 0 : i32
    %c0_i32_1 = arith.constant 0 : i32
    return %c0_i32, %c0_i32_0 : i32, i32
  }
  func.func @transform_2(%arg0: i32) -> (i32, i32) {
    %c0_i32 = arith.constant 0 : i32
    %c0_i32_0 = arith.constant 0 : i32
    %c0_i32_1 = arith.constant 0 : i32
    return %c0_i32, %c0_i32_0 : i32, i32
  }
  func.func @transform_3(%arg0: i32) -> (i32, i32) {
    %c0_i32 = arith.constant 0 : i32
    %c0_i32_0 = arith.constant 0 : i32
    %c0_i32_1 = arith.constant 0 : i32
    return %c0_i32, %c0_i32_0 : i32, i32
  }
  func.func @transform_4(%arg0: i32) -> (i32, i32) {
    %c0_i32 = arith.constant 0 : i32
    %c0_i32_0 = arith.constant 0 : i32
    %c0_i32_1 = arith.constant 0 : i32
    return %c0_i32, %c0_i32_0 : i32, i32
  }
  func.func @transform_5(%arg0: i32) -> (i32, i32) {
    %c0_i32 = arith.constant 0 : i32
    %c0_i32_0 = arith.constant 0 : i32
    %c0_i32_1 = arith.constant 0 : i32
    return %c0_i32, %c0_i32_0 : i32, i32
  }
  func.func @transform_6(%arg0: i32) -> (i32, i32) {
    %c0_i32 = arith.constant 0 : i32
    %c0_i32_0 = arith.constant 0 : i32
    %c0_i32_1 = arith.constant 0 : i32
    return %c0_i32, %c0_i32_0 : i32, i32
  }
  func.func @transform_7(%arg0: i32) -> (i32, i32) {
    %c0_i32 = arith.constant 0 : i32
    %c0_i32_0 = arith.constant 0 : i32
    %c0_i32_1 = arith.constant 0 : i32
    return %c0_i32, %c0_i32_0 : i32, i32
  }
  func.func @transform_8(%arg0: i32) -> (i32, i32) {
    %c0_i32 = arith.constant 0 : i32
    %c0_i32_0 = arith.constant 0 : i32
    %c0_i32_1 = arith.constant 0 : i32
    return %c0_i32, %c0_i32_0 : i32, i32
  }
  func.func @transform_9(%arg0: i32) -> (i32, i32) {
    %c0_i32 = arith.constant 0 : i32
    %c0_i32_0 = arith.constant 0 : i32
    %c0_i32_1 = arith.constant 0 : i32
    return %c0_i32, %c0_i32_0 : i32, i32
  }
  func.func @transform_10(%arg0: i32) -> (i32, i32) {
    %c0_i32 = arith.constant 0 : i32
    %c0_i32_0 = arith.constant 0 : i32
    %c0_i32_1 = arith.constant 0 : i32
    return %c0_i32, %c0_i32_0 : i32, i32
  }
  func.func @transform_11(%arg0: i32) -> (i32, i32) {
    %c0_i32 = arith.constant 0 : i32
    %c0_i32_0 = arith.constant 0 : i32
    %c0_i32_1 = arith.constant 0 : i32
    return %c0_i32, %c0_i32_0 : i32, i32
  }
  func.func @transform_12(%arg0: i32) -> (i32, i32) {
    %c0_i32 = arith.constant 0 : i32
    %c0_i32_0 = arith.constant 0 : i32
    %c0_i32_1 = arith.constant 0 : i32
    return %c0_i32, %c0_i32_0 : i32, i32
  }
  func.func @transform_13(%arg0: i32) -> (i32, i32) {
    %c0_i32 = arith.constant 0 : i32
    %c0_i32_0 = arith.constant 0 : i32
    return %c0_i32, %arg0 : i32, i32
  }
}

</mosaic_0001>

<llo_original>
// kernel: convolutional_network_forward.1
$region0: #{convolutional_network_forward.1}
  #allocation0 [shape = 'u32[]', space=smem, size = 0x4, offset = 0x4, fixed_abs, tag = 'smem constant byte address 0x4 - core index']
  #allocation1 [shape = 'u32[72,128]{1,0:T(1,128)}', space=vmem, size = 0x9000, scoped, tag = 'internal scratch']
  %s0 = inlined_call_operand.vmem [shape: f32[2,128], index: 0, kind: input, shape index: {}]
  %s1 = inlined_call_operand.vmem [shape: bf16[240,128], index: 1, kind: input, shape index: {}]
  %s2 = inlined_call_operand.vmem [shape: f32[120,1], index: 2, kind: input, shape index: {}]
  %s3 = inlined_call_operand.vmem [shape: bf16[224,120], index: 3, kind: input, shape index: {}]
  %s4 = inlined_call_operand.vmem [shape: f32[112,1], index: 4, kind: input, shape index: {}]
  %s5 = inlined_call_operand.vmem [shape: bf16[96,112], index: 5, kind: input, shape index: {}]
  %s6 = inlined_call_operand.vmem [shape: f32[48,1], index: 6, kind: input, shape index: {}]
  %s7 = inlined_call_operand.vmem [shape: bf16[32,48], index: 7, kind: input, shape index: {}]
  %s8 = inlined_call_operand.vmem [shape: f32[32,1], index: 8, kind: input, shape index: {}]
  %s9 = inlined_call_operand.vmem [shape: bf16[16,32], index: 9, kind: input, shape index: {}]
  %s10 = inlined_call_operand.vmem [shape: f32[16,1], index: 10, kind: input, shape index: {}]
  %s11 = inlined_call_operand.vmem [shape: bf16[3,16], index: 11, kind: input, shape index: {}]
  %s12 = inlined_call_operand.vmem [shape: f32[3,1], index: 12, kind: input, shape index: {}]
  %s13 = inlined_call_operand.vmem [shape: f32[3,128], index: 13, kind: output, shape index: {}]
  %s14 = sld [smem:[#allocation0]]
  $region62: #{convolutional_network_forward.1} parent=0
    _
  %s16 = ssub.s32 1, %s14
  %s17 = scalar_select 0, %s16, %s14
  // Predicated region
  $region2: #{convolutional_network_forward.1} parent=0 // pred_check
    _
  $region3: #{convolutional_network_forward.1} parent=0 // pred_check_branch
    %19 = sbr.rel (0) target = $region5
  $region4: #{convolutional_network_forward.1} parent=0 // pred_region
    _
  $region5: #{convolutional_network_forward.1} parent=0 // pred_fallthru
    _
  // Predicated region
  $region6: #{convolutional_network_forward.1} parent=0 // pred_check
    _
  $region7: #{convolutional_network_forward.1} parent=0 // pred_check_branch
    %21 = sbr.rel (0) target = $region9
  $region8: #{convolutional_network_forward.1} parent=0 // pred_region
    _
  $region9: #{convolutional_network_forward.1} parent=0 // pred_fallthru
    _
  // Predicated region
  $region10: #{convolutional_network_forward.1} parent=0 // pred_check
    _
  $region11: #{convolutional_network_forward.1} parent=0 // pred_check_branch
    %23 = sbr.rel (0) target = $region13
  $region12: #{convolutional_network_forward.1} parent=0 // pred_region
    _
  $region13: #{convolutional_network_forward.1} parent=0 // pred_fallthru
    _
  // Predicated region
  $region14: #{convolutional_network_forward.1} parent=0 // pred_check
    _
  $region15: #{convolutional_network_forward.1} parent=0 // pred_check_branch
    %25 = sbr.rel (0) target = $region17
  $region16: #{convolutional_network_forward.1} parent=0 // pred_region
    _
  $region17: #{convolutional_network_forward.1} parent=0 // pred_fallthru
    _
  // Predicated region
  $region18: #{convolutional_network_forward.1} parent=0 // pred_check
    _
  $region19: #{convolutional_network_forward.1} parent=0 // pred_check_branch
    %27 = sbr.rel (0) target = $region21
  $region20: #{convolutional_network_forward.1} parent=0 // pred_region
    _
  $region21: #{convolutional_network_forward.1} parent=0 // pred_fallthru
    _
  // Predicated region
  $region22: #{convolutional_network_forward.1} parent=0 // pred_check
    _
  $region23: #{convolutional_network_forward.1} parent=0 // pred_check_branch
    %29 = sbr.rel (0) target = $region25
  $region24: #{convolutional_network_forward.1} parent=0 // pred_region
    _
  $region25: #{convolutional_network_forward.1} parent=0 // pred_fallthru
    _
  // Predicated region
  $region26: #{convolutional_network_forward.1} parent=0 // pred_check
    _
  $region27: #{convolutional_network_forward.1} parent=0 // pred_check_branch
    %31 = sbr.rel (0) target = $region29
  $region28: #{convolutional_network_forward.1} parent=0 // pred_region
    _
  $region29: #{convolutional_network_forward.1} parent=0 // pred_fallthru
    _
  // Predicated region
  $region30: #{convolutional_network_forward.1} parent=0 // pred_check
    _
  $region31: #{convolutional_network_forward.1} parent=0 // pred_check_branch
    %33 = sbr.rel (0) target = $region33
  $region32: #{convolutional_network_forward.1} parent=0 // pred_region
    _
  $region33: #{convolutional_network_forward.1} parent=0 // pred_fallthru
    _
  // Predicated region
  $region34: #{convolutional_network_forward.1} parent=0 // pred_check
    _
  $region35: #{convolutional_network_forward.1} parent=0 // pred_check_branch
    %35 = sbr.rel (0) target = $region37
  $region36: #{convolutional_network_forward.1} parent=0 // pred_region
    _
  $region37: #{convolutional_network_forward.1} parent=0 // pred_fallthru
    _
  // Predicated region
  $region38: #{convolutional_network_forward.1} parent=0 // pred_check
    _
  $region39: #{convolutional_network_forward.1} parent=0 // pred_check_branch
    %37 = sbr.rel (0) target = $region41
  $region40: #{convolutional_network_forward.1} parent=0 // pred_region
    _
  $region41: #{convolutional_network_forward.1} parent=0 // pred_fallthru
    _
  // Predicated region
  $region42: #{convolutional_network_forward.1} parent=0 // pred_check
    _
  $region43: #{convolutional_network_forward.1} parent=0 // pred_check_branch
    %39 = sbr.rel (0) target = $region45
  $region44: #{convolutional_network_forward.1} parent=0 // pred_region
    _
  $region45: #{convolutional_network_forward.1} parent=0 // pred_fallthru
    _
  // Predicated region
  $region46: #{convolutional_network_forward.1} parent=0 // pred_check
    _
  $region47: #{convolutional_network_forward.1} parent=0 // pred_check_branch
    %41 = sbr.rel (0) target = $region49
  $region48: #{convolutional_network_forward.1} parent=0 // pred_region
    _
  $region49: #{convolutional_network_forward.1} parent=0 // pred_fallthru
    _
  // Predicated region
  $region50: #{convolutional_network_forward.1} parent=0 // pred_check
    _
  $region51: #{convolutional_network_forward.1} parent=0 // pred_check_branch
    %43 = sbr.rel (0) target = $region53
  $region52: #{convolutional_network_forward.1} parent=0 // pred_region
    _
  $region53: #{convolutional_network_forward.1} parent=0 // pred_fallthru
    _
  %v45 = vld [vmem:[%s0] sm:$0xff]
  %v46 = vld [vmem:[%s0 + $0x8] sm:$0xff]
  %v47 = vld [vmem:[%s0 + $0x10] sm:$0xff]
  %v48 = vld [vmem:[%s0 + $0x18] sm:$0xff]
  %v49 = vld [vmem:[%s0 + $0x20] sm:$0xff]
  %v50 = vld [vmem:[%s0 + $0x28] sm:$0xff]
  %v51 = vld [vmem:[%s0 + $0x30] sm:$0xff]
  %v52 = vld [vmem:[%s0 + $0x38] sm:$0xff]
  %v53 = vld [vmem:[%s0 + $0x40] sm:$0xff]
  %v54 = vld [vmem:[%s0 + $0x48] sm:$0xff]
  %v55 = vld [vmem:[%s0 + $0x50] sm:$0xff]
  %v56 = vld [vmem:[%s0 + $0x58] sm:$0xff]
  %v57 = vld [vmem:[%s0 + $0x60] sm:$0xff]
  %v58 = vld [vmem:[%s0 + $0x68] sm:$0xff]
  %v59 = vld [vmem:[%s0 + $0x70] sm:$0xff]
  %v60 = vld [vmem:[%s0 + $0x78] sm:$0xff]
  %v61 = vpack.c.bf16 %v46, %v45
  %v62 = vpack.c.bf16 %v48, %v47
  %v63 = vpack.c.bf16 %v50, %v49
  %v64 = vpack.c.bf16 %v52, %v51
  %v65 = vpack.c.bf16 %v54, %v53
  %v66 = vpack.c.bf16 %v56, %v55
  %v67 = vpack.c.bf16 %v58, %v57
  %v68 = vpack.c.bf16 %v60, %v59
  %v69 = vld [vmem:[%s1] sm:$0xf]
  %v70 = vld [vmem:[%s1 + $0x4] sm:$0xf]
  %v71 = vld [vmem:[%s1 + $0x8] sm:$0xf]
  %v72 = vld [vmem:[%s1 + $0xc] sm:$0xf]
  %v73 = vld [vmem:[%s1 + $0x10] sm:$0xf]
  %v74 = vld [vmem:[%s1 + $0x14] sm:$0xf]
  %v75 = vld [vmem:[%s1 + $0x18] sm:$0xf]
  %v76 = vld [vmem:[%s1 + $0x1c] sm:$0xf]
  %v77 = vld [vmem:[%s1 + $0x20] sm:$0xf]
  %v78 = vld [vmem:[%s1 + $0x24] sm:$0xf]
  %v79 = vld [vmem:[%s1 + $0x28] sm:$0xf]
  %v80 = vld [vmem:[%s1 + $0x2c] sm:$0xf]
  %v81 = vld [vmem:[%s1 + $0x30] sm:$0xf]
  %v82 = vld [vmem:[%s1 + $0x34] sm:$0xf]
  %v83 = vld [vmem:[%s1 + $0x38] sm:$0xf]
  %v84 = vld [vmem:[%s1 + $0x3c] sm:$0xf]
  %v85 = vld [vmem:[%s1 + $0x40] sm:$0xf]
  %v86 = vld [vmem:[%s1 + $0x44] sm:$0xf]
  %v87 = vld [vmem:[%s1 + $0x48] sm:$0xf]
  %v88 = vld [vmem:[%s1 + $0x4c] sm:$0xf]
  %v89 = vld [vmem:[%s1 + $0x50] sm:$0xf]
  %v90 = vld [vmem:[%s1 + $0x54] sm:$0xf]
  %v91 = vld [vmem:[%s1 + $0x58] sm:$0xf]
  %v92 = vld [vmem:[%s1 + $0x5c] sm:$0xf]
  %v93 = vld [vmem:[%s1 + $0x60] sm:$0xf]
  %v94 = vld [vmem:[%s1 + $0x64] sm:$0xf]
  %v95 = vld [vmem:[%s1 + $0x68] sm:$0xf]
  %v96 = vld [vmem:[%s1 + $0x6c] sm:$0xf]
  %v97 = vld [vmem:[%s1 + $0x70] sm:$0xf]
  %v98 = vld [vmem:[%s1 + $0x74] sm:$0xf]
  %v129 = vunpack.c.l.b16 %v69
  %v130 = vunpack.c.l.b16 %v70
  %v131 = vunpack.c.l.b16 %v71
  %v132 = vunpack.c.l.b16 %v72
  %v133 = vunpack.c.l.b16 %v73
  %v134 = vunpack.c.l.b16 %v74
  %v135 = vunpack.c.l.b16 %v75
  %v136 = vunpack.c.l.b16 %v76
  %v137 = vunpack.c.l.b16 %v77
  %v138 = vunpack.c.l.b16 %v78
  %v139 = vunpack.c.l.b16 %v79
  %v140 = vunpack.c.l.b16 %v80
  %v141 = vunpack.c.l.b16 %v81
  %v142 = vunpack.c.l.b16 %v82
  %v143 = vunpack.c.l.b16 %v83
  %v144 = vunpack.c.l.b16 %v84
  %v145 = vunpack.c.l.b16 %v85
  %v146 = vunpack.c.l.b16 %v86
  %v147 = vunpack.c.l.b16 %v87
  %v148 = vunpack.c.l.b16 %v88
  %v149 = vunpack.c.l.b16 %v89
  %v150 = vunpack.c.l.b16 %v90
  %v151 = vunpack.c.l.b16 %v91
  %v152 = vunpack.c.l.b16 %v92
  %v153 = vunpack.c.l.b16 %v93
  %v154 = vunpack.c.l.b16 %v94
  %v155 = vunpack.c.l.b16 %v95
  %v156 = vunpack.c.l.b16 %v96
  %v157 = vunpack.c.l.b16 %v97
  %v158 = vunpack.c.l.b16 %v98
  %v159 = vpack.c.b16 %v130, %v129
  %v160 = vpack.c.b16 %v132, %v131
  %v161 = vpack.c.b16 %v134, %v133
  %v162 = vpack.c.b16 %v136, %v135
  %v163 = vpack.c.b16 %v138, %v137
  %v164 = vpack.c.b16 %v140, %v139
  %v165 = vpack.c.b16 %v142, %v141
  %v166 = vpack.c.b16 %v144, %v143
  %v167 = vpack.c.b16 %v146, %v145
  %v168 = vpack.c.b16 %v148, %v147
  %v169 = vpack.c.b16 %v150, %v149
  %v170 = vpack.c.b16 %v152, %v151
  %v171 = vpack.c.b16 %v154, %v153
  %v172 = vpack.c.b16 %v156, %v155
  %v173 = vpack.c.b16 %v158, %v157
  %189 = vmatpush.bf16.xpose.msra.mxu0 %v68
  %190 = vmatpush.bf16.xpose.msra.mxu0 %v67
  %191 = vmatpush.bf16.xpose.msra.mxu0 %v66
  %192 = vmatpush.bf16.xpose.msra.mxu0 %v65
  %193 = vmatpush.bf16.xpose.msra.mxu0 %v64
  %194 = vmatpush.bf16.xpose.msra.mxu0 %v63
  %195 = vmatpush.bf16.xpose.msra.mxu0 %v62
  %196 = vmatpush.bf16.xpose.msra.mxu0 %v61
  %197 = vmatmul.bf16.gmra.mxu0 %v159
  %v198 = vpop.f32.mrf.mxu0
  %v199 = vadd.f32 0.0, %v198
  %v200 = vpop.f32.mrf.mxu0
  %v201 = vadd.f32 0.0, %v200
  %202 = vmatmul.bf16.gmra.mxu0 %v160
  %v203 = vpop.f32.mrf.mxu0
  %v204 = vadd.f32 0.0, %v203
  %v205 = vpop.f32.mrf.mxu0
  %v206 = vadd.f32 0.0, %v205
  %207 = vmatmul.bf16.gmra.mxu0 %v161
  %v208 = vpop.f32.mrf.mxu0
  %v209 = vadd.f32 0.0, %v208
  %v210 = vpop.f32.mrf.mxu0
  %v211 = vadd.f32 0.0, %v210
  %212 = vmatmul.bf16.gmra.mxu0 %v162
  %v213 = vpop.f32.mrf.mxu0
  %v214 = vadd.f32 0.0, %v213
  %v215 = vpop.f32.mrf.mxu0
  %v216 = vadd.f32 0.0, %v215
  %217 = vmatmul.bf16.gmra.mxu0 %v163
  %v218 = vpop.f32.mrf.mxu0
  %v219 = vadd.f32 0.0, %v218
  %v220 = vpop.f32.mrf.mxu0
  %v221 = vadd.f32 0.0, %v220
  %222 = vmatmul.bf16.gmra.mxu0 %v164
  %v223 = vpop.f32.mrf.mxu0
  %v224 = vadd.f32 0.0, %v223
  %v225 = vpop.f32.mrf.mxu0
  %v226 = vadd.f32 0.0, %v225
  %227 = vmatmul.bf16.gmra.mxu0 %v165
  %v228 = vpop.f32.mrf.mxu0
  %v229 = vadd.f32 0.0, %v228
  %v230 = vpop.f32.mrf.mxu0
  %v231 = vadd.f32 0.0, %v230
  %232 = vmatmul.bf16.gmra.mxu0 %v166
  %v233 = vpop.f32.mrf.mxu0
  %v234 = vadd.f32 0.0, %v233
  %v235 = vpop.f32.mrf.mxu0
  %v236 = vadd.f32 0.0, %v235
  %237 = vmatmul.bf16.gmra.mxu0 %v167
  %v238 = vpop.f32.mrf.mxu0
  %v239 = vadd.f32 0.0, %v238
  %v240 = vpop.f32.mrf.mxu0
  %v241 = vadd.f32 0.0, %v240
  %242 = vmatmul.bf16.gmra.mxu0 %v168
  %v243 = vpop.f32.mrf.mxu0
  %v244 = vadd.f32 0.0, %v243
  %v245 = vpop.f32.mrf.mxu0
  %v246 = vadd.f32 0.0, %v245
  %247 = vmatmul.bf16.gmra.mxu0 %v169
  %v248 = vpop.f32.mrf.mxu0
  %v249 = vadd.f32 0.0, %v248
  %v250 = vpop.f32.mrf.mxu0
  %v251 = vadd.f32 0.0, %v250
  %252 = vmatmul.bf16.gmra.mxu0 %v170
  %v253 = vpop.f32.mrf.mxu0
  %v254 = vadd.f32 0.0, %v253
  %v255 = vpop.f32.mrf.mxu0
  %v256 = vadd.f32 0.0, %v255
  %257 = vmatmul.bf16.gmra.mxu0 %v171
  %v258 = vpop.f32.mrf.mxu0
  %v259 = vadd.f32 0.0, %v258
  %v260 = vpop.f32.mrf.mxu0
  %v261 = vadd.f32 0.0, %v260
  %262 = vmatmul.bf16.gmra.mxu0 %v172
  %v263 = vpop.f32.mrf.mxu0
  %v264 = vadd.f32 0.0, %v263
  %v265 = vpop.f32.mrf.mxu0
  %v266 = vadd.f32 0.0, %v265
  %267 = vmatmul.bf16.gmra.mxu0 %v173
  %v268 = vpop.f32.mrf.mxu0
  %v269 = vadd.f32 0.0, %v268
  %v270 = vpop.f32.mrf.mxu0
  %v271 = vadd.f32 0.0, %v270
  %272 = vdwg.mxu0
  %v273 = vmax.f32 %v199, %v236
  %v274 = vmax.f32 %v201, %v239
  %v275 = vmax.f32 %v204, %v241
  %v276 = vmax.f32 %v206, %v244
  %v277 = vmax.f32 %v209, %v246
  %v278 = vmax.f32 %v211, %v249
  %v279 = vmax.f32 %v214, %v251
  %v280 = vmax.f32 %v216, %v254
  %v281 = vmax.f32 %v219, %v256
  %v282 = vmax.f32 %v221, %v259
  %v283 = vmax.f32 %v224, %v261
  %v284 = vmax.f32 %v226, %v264
  %v285 = vmax.f32 %v229, %v266
  %v286 = vmax.f32 %v231, %v269
  %v287 = vmax.f32 %v234, %v271
  %v288 = vld [vmem:[%s2] sm:$0xff]
  %v289 = vld [vmem:[%s2 + $0x8] sm:$0xff]
  %v290 = vld [vmem:[%s2 + $0x10] sm:$0xff]
  %v291 = vld [vmem:[%s2 + $0x18] sm:$0xff]
  %v292 = vld [vmem:[%s2 + $0x20] sm:$0xff]
  %v293 = vld [vmem:[%s2 + $0x28] sm:$0xff]
  %v294 = vld [vmem:[%s2 + $0x30] sm:$0xff]
  %v295 = vld [vmem:[%s2 + $0x38] sm:$0xff]
  %v296 = vld [vmem:[%s2 + $0x40] sm:$0xff]
  %v297 = vld [vmem:[%s2 + $0x48] sm:$0xff]
  %v298 = vld [vmem:[%s2 + $0x50] sm:$0xff]
  %v299 = vld [vmem:[%s2 + $0x58] sm:$0xff]
  %v300 = vld [vmem:[%s2 + $0x60] sm:$0xff]
  %v301 = vld [vmem:[%s2 + $0x68] sm:$0xff]
  %v302 = vld [vmem:[%s2 + $0x70] sm:$0xff]
  %304 = vset.pattern.permute.xlu0 0
  %305 = vperm.xlu0 %304, %v288
  %v306 = vpop.permute.xlu0 %305
  %309 = vset.pattern.permute.xlu0 0
  %310 = vperm.xlu0 %309, %v289
  %v311 = vpop.permute.xlu0 %310
  %314 = vset.pattern.permute.xlu0 0
  %315 = vperm.xlu0 %314, %v290
  %v316 = vpop.permute.xlu0 %315
  %319 = vset.pattern.permute.xlu0 0
  %320 = vperm.xlu0 %319, %v291
  %v321 = vpop.permute.xlu0 %320
  %324 = vset.pattern.permute.xlu0 0
  %325 = vperm.xlu0 %324, %v292
  %v326 = vpop.permute.xlu0 %325
  %329 = vset.pattern.permute.xlu0 0
  %330 = vperm.xlu0 %329, %v293
  %v331 = vpop.permute.xlu0 %330
  %334 = vset.pattern.permute.xlu0 0
  %335 = vperm.xlu0 %334, %v294
  %v336 = vpop.permute.xlu0 %335
  %339 = vset.pattern.permute.xlu0 0
  %340 = vperm.xlu0 %339, %v295
  %v341 = vpop.permute.xlu0 %340
  %344 = vset.pattern.permute.xlu0 0
  %345 = vperm.xlu0 %344, %v296
  %v346 = vpop.permute.xlu0 %345
  %349 = vset.pattern.permute.xlu0 0
  %350 = vperm.xlu0 %349, %v297
  %v351 = vpop.permute.xlu0 %350
  %354 = vset.pattern.permute.xlu0 0
  %355 = vperm.xlu0 %354, %v298
  %v356 = vpop.permute.xlu0 %355
  %359 = vset.pattern.permute.xlu0 0
  %360 = vperm.xlu0 %359, %v299
  %v361 = vpop.permute.xlu0 %360
  %364 = vset.pattern.permute.xlu0 0
  %365 = vperm.xlu0 %364, %v300
  %v366 = vpop.permute.xlu0 %365
  %369 = vset.pattern.permute.xlu0 0
  %370 = vperm.xlu0 %369, %v301
  %v371 = vpop.permute.xlu0 %370
  %374 = vset.pattern.permute.xlu0 0
  %375 = vperm.xlu0 %374, %v302
  %v376 = vpop.permute.xlu0 %375
  %v378 = vadd.f32 %v273, %v306
  %v379 = vadd.f32 %v274, %v311
  %v380 = vadd.f32 %v275, %v316
  %v381 = vadd.f32 %v276, %v321
  %v382 = vadd.f32 %v277, %v326
  %v383 = vadd.f32 %v278, %v331
  %v384 = vadd.f32 %v279, %v336
  %v385 = vadd.f32 %v280, %v341
  %v386 = vadd.f32 %v281, %v346
  %v387 = vadd.f32 %v282, %v351
  %v388 = vadd.f32 %v283, %v356
  %v389 = vadd.f32 %v284, %v361
  %v390 = vadd.f32 %v285, %v366
  %v391 = vadd.f32 %v286, %v371
  %v392 = vadd.f32 %v287, %v376
  %v393 = vmax.f32 %v378, 0.0
  %v394 = vmax.f32 %v379, 0.0
  %v395 = vmax.f32 %v380, 0.0
  %v396 = vmax.f32 %v381, 0.0
  %v397 = vmax.f32 %v382, 0.0
  %v398 = vmax.f32 %v383, 0.0
  %v399 = vmax.f32 %v384, 0.0
  %v400 = vmax.f32 %v385, 0.0
  %v401 = vmax.f32 %v386, 0.0
  %v402 = vmax.f32 %v387, 0.0
  %v403 = vmax.f32 %v388, 0.0
  %v404 = vmax.f32 %v389, 0.0
  %v405 = vmax.f32 %v390, 0.0
  %v406 = vmax.f32 %v391, 0.0
  %v407 = vmax.f32 %v392, 0.0
  %v408 = vld [vmem:[%s3] sm:$0xf]
  %v409 = vld [vmem:[%s3 + $0x4] sm:$0xf]
  %v410 = vld [vmem:[%s3 + $0x8] sm:$0xf]
  %v411 = vld [vmem:[%s3 + $0xc] sm:$0xf]
  %v412 = vld [vmem:[%s3 + $0x10] sm:$0xf]
  %v413 = vld [vmem:[%s3 + $0x14] sm:$0xf]
  %v414 = vld [vmem:[%s3 + $0x18] sm:$0xf]
  %v415 = vld [vmem:[%s3 + $0x1c] sm:$0xf]
  %v416 = vld [vmem:[%s3 + $0x20] sm:$0xf]
  %v417 = vld [vmem:[%s3 + $0x24] sm:$0xf]
  %v418 = vld [vmem:[%s3 + $0x28] sm:$0xf]
  %v419 = vld [vmem:[%s3 + $0x2c] sm:$0xf]
  %v420 = vld [vmem:[%s3 + $0x30] sm:$0xf]
  %v421 = vld [vmem:[%s3 + $0x34] sm:$0xf]
  %v422 = vld [vmem:[%s3 + $0x38] sm:$0xf]
  %v423 = vld [vmem:[%s3 + $0x3c] sm:$0xf]
  %v424 = vld [vmem:[%s3 + $0x40] sm:$0xf]
  %v425 = vld [vmem:[%s3 + $0x44] sm:$0xf]
  %v426 = vld [vmem:[%s3 + $0x48] sm:$0xf]
  %v427 = vld [vmem:[%s3 + $0x4c] sm:$0xf]
  %v428 = vld [vmem:[%s3 + $0x50] sm:$0xf]
  %v429 = vld [vmem:[%s3 + $0x54] sm:$0xf]
  %v430 = vld [vmem:[%s3 + $0x58] sm:$0xf]
  %v431 = vld [vmem:[%s3 + $0x5c] sm:$0xf]
  %v432 = vld [vmem:[%s3 + $0x60] sm:$0xf]
  %v433 = vld [vmem:[%s3 + $0x64] sm:$0xf]
  %v434 = vld [vmem:[%s3 + $0x68] sm:$0xf]
  %v435 = vld [vmem:[%s3 + $0x6c] sm:$0xf]
  %v436 = vpack.c.bf16 %v394, %v393
  %v437 = vpack.c.bf16 %v396, %v395
  %v438 = vpack.c.bf16 %v398, %v397
  %v439 = vpack.c.bf16 %v400, %v399
  %v440 = vpack.c.bf16 %v402, %v401
  %v441 = vpack.c.bf16 %v404, %v403
  %v442 = vpack.c.bf16 %v406, %v405
  %v443 = vpack.c.bf16 %v407, %v407
  %v472 = vunpack.c.l.b16 %v408
  %v473 = vunpack.c.l.b16 %v409
  %v474 = vunpack.c.l.b16 %v410
  %v475 = vunpack.c.l.b16 %v411
  %v476 = vunpack.c.l.b16 %v412
  %v477 = vunpack.c.l.b16 %v413
  %v478 = vunpack.c.l.b16 %v414
  %v479 = vunpack.c.l.b16 %v415
  %v480 = vunpack.c.l.b16 %v416
  %v481 = vunpack.c.l.b16 %v417
  %v482 = vunpack.c.l.b16 %v418
  %v483 = vunpack.c.l.b16 %v419
  %v484 = vunpack.c.l.b16 %v420
  %v485 = vunpack.c.l.b16 %v421
  %v486 = vunpack.c.l.b16 %v422
  %v487 = vunpack.c.l.b16 %v423
  %v488 = vunpack.c.l.b16 %v424
  %v489 = vunpack.c.l.b16 %v425
  %v490 = vunpack.c.l.b16 %v426
  %v491 = vunpack.c.l.b16 %v427
  %v492 = vunpack.c.l.b16 %v428
  %v493 = vunpack.c.l.b16 %v429
  %v494 = vunpack.c.l.b16 %v430
  %v495 = vunpack.c.l.b16 %v431
  %v496 = vunpack.c.l.b16 %v432
  %v497 = vunpack.c.l.b16 %v433
  %v498 = vunpack.c.l.b16 %v434
  %v499 = vunpack.c.l.b16 %v435
  %v500 = vpack.c.b16 %v473, %v472
  %v501 = vpack.c.b16 %v475, %v474
  %v502 = vpack.c.b16 %v477, %v476
  %v503 = vpack.c.b16 %v479, %v478
  %v504 = vpack.c.b16 %v481, %v480
  %v505 = vpack.c.b16 %v483, %v482
  %v506 = vpack.c.b16 %v485, %v484
  %v507 = vpack.c.b16 %v487, %v486
  %v508 = vpack.c.b16 %v489, %v488
  %v509 = vpack.c.b16 %v491, %v490
  %v510 = vpack.c.b16 %v493, %v492
  %v511 = vpack.c.b16 %v495, %v494
  %v512 = vpack.c.b16 %v497, %v496
  %v513 = vpack.c.b16 %v499, %v498
  %vm514 = vcmask 982016
  %v516 = vsel %vm514, %v500, 0
  %v519 = vsel %vm514, %v501, 0
  %v522 = vsel %vm514, %v502, 0
  %v525 = vsel %vm514, %v503, 0
  %v528 = vsel %vm514, %v504, 0
  %v531 = vsel %vm514, %v505, 0
  %v534 = vsel %vm514, %v506, 0
  %v537 = vsel %vm514, %v507, 0
  %v540 = vsel %vm514, %v508, 0
  %v543 = vsel %vm514, %v509, 0
  %v546 = vsel %vm514, %v510, 0
  %v549 = vsel %vm514, %v511, 0
  %v552 = vsel %vm514, %v512, 0
  %v555 = vsel %vm514, %v513, 0
  %vm557 = vcmask 1043456
  %v559 = vsel %vm557, %v443, 0
  %561 = vmatpush.bf16.msra.mxu0 %v559
  %562 = vmatpush.bf16.msra.mxu0 %v442
  %563 = vmatpush.bf16.msra.mxu0 %v441
  %564 = vmatpush.bf16.msra.mxu0 %v440
  %565 = vmatpush.bf16.msra.mxu0 %v439
  %566 = vmatpush.bf16.msra.mxu0 %v438
  %567 = vmatpush.bf16.msra.mxu0 %v437
  %568 = vmatpush.bf16.msra.mxu0 %v436
  %569 = vmatmul.bf16.gmra.mxu0 %v516
  %v570 = vpop.f32.mrf.mxu0
  %v571 = vadd.f32 0.0, %v570
  %v572 = vpop.f32.mrf.mxu0
  %v573 = vadd.f32 0.0, %v572
  %574 = vmatmul.bf16.gmra.mxu0 %v519
  %v575 = vpop.f32.mrf.mxu0
  %v576 = vadd.f32 0.0, %v575
  %v577 = vpop.f32.mrf.mxu0
  %v578 = vadd.f32 0.0, %v577
  %579 = vmatmul.bf16.gmra.mxu0 %v522
  %v580 = vpop.f32.mrf.mxu0
  %v581 = vadd.f32 0.0, %v580
  %v582 = vpop.f32.mrf.mxu0
  %v583 = vadd.f32 0.0, %v582
  %584 = vmatmul.bf16.gmra.mxu0 %v525
  %v585 = vpop.f32.mrf.mxu0
  %v586 = vadd.f32 0.0, %v585
  %v587 = vpop.f32.mrf.mxu0
  %v588 = vadd.f32 0.0, %v587
  %589 = vmatmul.bf16.gmra.mxu0 %v528
  %v590 = vpop.f32.mrf.mxu0
  %v591 = vadd.f32 0.0, %v590
  %v592 = vpop.f32.mrf.mxu0
  %v593 = vadd.f32 0.0, %v592
  %594 = vmatmul.bf16.gmra.mxu0 %v531
  %v595 = vpop.f32.mrf.mxu0
  %v596 = vadd.f32 0.0, %v595
  %v597 = vpop.f32.mrf.mxu0
  %v598 = vadd.f32 0.0, %v597
  %599 = vmatmul.bf16.gmra.mxu0 %v534
  %v600 = vpop.f32.mrf.mxu0
  %v601 = vadd.f32 0.0, %v600
  %v602 = vpop.f32.mrf.mxu0
  %v603 = vadd.f32 0.0, %v602
  %604 = vmatmul.bf16.gmra.mxu0 %v537
  %v605 = vpop.f32.mrf.mxu0
  %v606 = vadd.f32 0.0, %v605
  %v607 = vpop.f32.mrf.mxu0
  %v608 = vadd.f32 0.0, %v607
  %609 = vmatmul.bf16.gmra.mxu0 %v540
  %v610 = vpop.f32.mrf.mxu0
  %v611 = vadd.f32 0.0, %v610
  %v612 = vpop.f32.mrf.mxu0
  %v613 = vadd.f32 0.0, %v612
  %614 = vmatmul.bf16.gmra.mxu0 %v543
  %v615 = vpop.f32.mrf.mxu0
  %v616 = vadd.f32 0.0, %v615
  %v617 = vpop.f32.mrf.mxu0
  %v618 = vadd.f32 0.0, %v617
  %619 = vmatmul.bf16.gmra.mxu0 %v546
  %v620 = vpop.f32.mrf.mxu0
  %v621 = vadd.f32 0.0, %v620
  %v622 = vpop.f32.mrf.mxu0
  %v623 = vadd.f32 0.0, %v622
  %624 = vmatmul.bf16.gmra.mxu0 %v549
  %v625 = vpop.f32.mrf.mxu0
  %v626 = vadd.f32 0.0, %v625
  %v627 = vpop.f32.mrf.mxu0
  %v628 = vadd.f32 0.0, %v627
  %629 = vmatmul.bf16.gmra.mxu0 %v552
  %v630 = vpop.f32.mrf.mxu0
  %v631 = vadd.f32 0.0, %v630
  %v632 = vpop.f32.mrf.mxu0
  %v633 = vadd.f32 0.0, %v632
  %634 = vmatmul.bf16.gmra.mxu0 %v555
  %v635 = vpop.f32.mrf.mxu0
  %v636 = vadd.f32 0.0, %v635
  %v637 = vpop.f32.mrf.mxu0
  %v638 = vadd.f32 0.0, %v637
  %639 = vdwg.mxu0
  %v640 = vmax.f32 %v571, %v606
  %v641 = vmax.f32 %v573, %v608
  %v642 = vmax.f32 %v576, %v611
  %v643 = vmax.f32 %v578, %v613
  %v644 = vmax.f32 %v581, %v616
  %v645 = vmax.f32 %v583, %v618
  %v646 = vmax.f32 %v586, %v621
  %v647 = vmax.f32 %v588, %v623
  %v648 = vmax.f32 %v591, %v626
  %v649 = vmax.f32 %v593, %v628
  %v650 = vmax.f32 %v596, %v631
  %v651 = vmax.f32 %v598, %v633
  %v652 = vmax.f32 %v601, %v636
  %v653 = vmax.f32 %v603, %v638
  %v654 = vld [vmem:[%s4] sm:$0xff]
  %v655 = vld [vmem:[%s4 + $0x8] sm:$0xff]
  %v656 = vld [vmem:[%s4 + $0x10] sm:$0xff]
  %v657 = vld [vmem:[%s4 + $0x18] sm:$0xff]
  %v658 = vld [vmem:[%s4 + $0x20] sm:$0xff]
  %v659 = vld [vmem:[%s4 + $0x28] sm:$0xff]
  %v660 = vld [vmem:[%s4 + $0x30] sm:$0xff]
  %v661 = vld [vmem:[%s4 + $0x38] sm:$0xff]
  %v662 = vld [vmem:[%s4 + $0x40] sm:$0xff]
  %v663 = vld [vmem:[%s4 + $0x48] sm:$0xff]
  %v664 = vld [vmem:[%s4 + $0x50] sm:$0xff]
  %v665 = vld [vmem:[%s4 + $0x58] sm:$0xff]
  %v666 = vld [vmem:[%s4 + $0x60] sm:$0xff]
  %v667 = vld [vmem:[%s4 + $0x68] sm:$0xff]
  %669 = vset.pattern.permute.xlu0 0
  %670 = vperm.xlu0 %669, %v654
  %v671 = vpop.permute.xlu0 %670
  %674 = vset.pattern.permute.xlu0 0
  %675 = vperm.xlu0 %674, %v655
  %v676 = vpop.permute.xlu0 %675
  %679 = vset.pattern.permute.xlu0 0
  %680 = vperm.xlu0 %679, %v656
  %v681 = vpop.permute.xlu0 %680
  %684 = vset.pattern.permute.xlu0 0
  %685 = vperm.xlu0 %684, %v657
  %v686 = vpop.permute.xlu0 %685
  %689 = vset.pattern.permute.xlu0 0
  %690 = vperm.xlu0 %689, %v658
  %v691 = vpop.permute.xlu0 %690
  %694 = vset.pattern.permute.xlu0 0
  %695 = vperm.xlu0 %694, %v659
  %v696 = vpop.permute.xlu0 %695
  %699 = vset.pattern.permute.xlu0 0
  %700 = vperm.xlu0 %699, %v660
  %v701 = vpop.permute.xlu0 %700
  %704 = vset.pattern.permute.xlu0 0
  %705 = vperm.xlu0 %704, %v661
  %v706 = vpop.permute.xlu0 %705
  %709 = vset.pattern.permute.xlu0 0
  %710 = vperm.xlu0 %709, %v662
  %v711 = vpop.permute.xlu0 %710
  %714 = vset.pattern.permute.xlu0 0
  %715 = vperm.xlu0 %714, %v663
  %v716 = vpop.permute.xlu0 %715
  %719 = vset.pattern.permute.xlu0 0
  %720 = vperm.xlu0 %719, %v664
  %v721 = vpop.permute.xlu0 %720
  %724 = vset.pattern.permute.xlu0 0
  %725 = vperm.xlu0 %724, %v665
  %v726 = vpop.permute.xlu0 %725
  %729 = vset.pattern.permute.xlu0 0
  %730 = vperm.xlu0 %729, %v666
  %v731 = vpop.permute.xlu0 %730
  %734 = vset.pattern.permute.xlu0 0
  %735 = vperm.xlu0 %734, %v667
  %v736 = vpop.permute.xlu0 %735
  %v738 = vadd.f32 %v640, %v671
  %v739 = vadd.f32 %v641, %v676
  %v740 = vadd.f32 %v642, %v681
  %v741 = vadd.f32 %v643, %v686
  %v742 = vadd.f32 %v644, %v691
  %v743 = vadd.f32 %v645, %v696
  %v744 = vadd.f32 %v646, %v701
  %v745 = vadd.f32 %v647, %v706
  %v746 = vadd.f32 %v648, %v711
  %v747 = vadd.f32 %v649, %v716
  %v748 = vadd.f32 %v650, %v721
  %v749 = vadd.f32 %v651, %v726
  %v750 = vadd.f32 %v652, %v731
  %v751 = vadd.f32 %v653, %v736
  %v752 = vmax.f32 %v738, 0.0
  %v753 = vmax.f32 %v739, 0.0
  %v754 = vmax.f32 %v740, 0.0
  %v755 = vmax.f32 %v741, 0.0
  %v756 = vmax.f32 %v742, 0.0
  %v757 = vmax.f32 %v743, 0.0
  %v758 = vmax.f32 %v744, 0.0
  %v759 = vmax.f32 %v745, 0.0
  %v760 = vmax.f32 %v746, 0.0
  %v761 = vmax.f32 %v747, 0.0
  %v762 = vmax.f32 %v748, 0.0
  %v763 = vmax.f32 %v749, 0.0
  %v764 = vmax.f32 %v750, 0.0
  %v765 = vmax.f32 %v751, 0.0
  %v766 = vld [vmem:[%s5] sm:$0xf]
  %v767 = vld [vmem:[%s5 + $0x4] sm:$0xf]
  %v768 = vld [vmem:[%s5 + $0x8] sm:$0xf]
  %v769 = vld [vmem:[%s5 + $0xc] sm:$0xf]
  %v770 = vld [vmem:[%s5 + $0x10] sm:$0xf]
  %v771 = vld [vmem:[%s5 + $0x14] sm:$0xf]
  %v772 = vld [vmem:[%s5 + $0x18] sm:$0xf]
  %v773 = vld [vmem:[%s5 + $0x1c] sm:$0xf]
  %v774 = vld [vmem:[%s5 + $0x20] sm:$0xf]
  %v775 = vld [vmem:[%s5 + $0x24] sm:$0xf]
  %v776 = vld [vmem:[%s5 + $0x28] sm:$0xf]
  %v777 = vld [vmem:[%s5 + $0x2c] sm:$0xf]
  %v778 = vpack.c.bf16 %v753, %v752
  %v779 = vpack.c.bf16 %v755, %v754
  %v780 = vpack.c.bf16 %v757, %v756
  %v781 = vpack.c.bf16 %v759, %v758
  %v782 = vpack.c.bf16 %v761, %v760
  %v783 = vpack.c.bf16 %v763, %v762
  %v784 = vpack.c.bf16 %v765, %v764
  %v797 = vunpack.c.l.b16 %v766
  %v798 = vunpack.c.l.b16 %v767
  %v799 = vunpack.c.l.b16 %v768
  %v800 = vunpack.c.l.b16 %v769
  %v801 = vunpack.c.l.b16 %v770
  %v802 = vunpack.c.l.b16 %v771
  %v803 = vunpack.c.l.b16 %v772
  %v804 = vunpack.c.l.b16 %v773
  %v805 = vunpack.c.l.b16 %v774
  %v806 = vunpack.c.l.b16 %v775
  %v807 = vunpack.c.l.b16 %v776
  %v808 = vunpack.c.l.b16 %v777
  %v809 = vpack.c.b16 %v798, %v797
  %v810 = vpack.c.b16 %v800, %v799
  %v811 = vpack.c.b16 %v802, %v801
  %v812 = vpack.c.b16 %v804, %v803
  %v813 = vpack.c.b16 %v806, %v805
  %v814 = vpack.c.b16 %v808, %v807
  %vm815 = vcmask 916480
  %v817 = vsel %vm815, %v809, 0
  %v820 = vsel %vm815, %v810, 0
  %v823 = vsel %vm815, %v811, 0
  %v826 = vsel %vm815, %v812, 0
  %v829 = vsel %vm815, %v813, 0
  %v832 = vsel %vm815, %v814, 0
  %834 = vmatpush.bf16.msra.mxu0 0
  %835 = vmatpush.bf16.msra.mxu0 %v784
  %836 = vmatpush.bf16.msra.mxu0 %v783
  %837 = vmatpush.bf16.msra.mxu0 %v782
  %838 = vmatpush.bf16.msra.mxu0 %v781
  %839 = vmatpush.bf16.msra.mxu0 %v780
  %840 = vmatpush.bf16.msra.mxu0 %v779
  %841 = vmatpush.bf16.msra.mxu0 %v778
  %842 = vmatmul.bf16.gmra.mxu0 %v817
  %v843 = vpop.f32.mrf.mxu0
  %v844 = vadd.f32 0.0, %v843
  %v845 = vpop.f32.mrf.mxu0
  %v846 = vadd.f32 0.0, %v845
  %847 = vmatmul.bf16.gmra.mxu0 %v820
  %v848 = vpop.f32.mrf.mxu0
  %v849 = vadd.f32 0.0, %v848
  %v850 = vpop.f32.mrf.mxu0
  %v851 = vadd.f32 0.0, %v850
  %852 = vmatmul.bf16.gmra.mxu0 %v823
  %v853 = vpop.f32.mrf.mxu0
  %v854 = vadd.f32 0.0, %v853
  %v855 = vpop.f32.mrf.mxu0
  %v856 = vadd.f32 0.0, %v855
  %857 = vmatmul.bf16.gmra.mxu0 %v826
  %v858 = vpop.f32.mrf.mxu0
  %v859 = vadd.f32 0.0, %v858
  %v860 = vpop.f32.mrf.mxu0
  %v861 = vadd.f32 0.0, %v860
  %862 = vmatmul.bf16.gmra.mxu0 %v829
  %v863 = vpop.f32.mrf.mxu0
  %v864 = vadd.f32 0.0, %v863
  %v865 = vpop.f32.mrf.mxu0
  %v866 = vadd.f32 0.0, %v865
  %867 = vmatmul.bf16.gmra.mxu0 %v832
  %v868 = vpop.f32.mrf.mxu0
  %v869 = vadd.f32 0.0, %v868
  %v870 = vpop.f32.mrf.mxu0
  %v871 = vadd.f32 0.0, %v870
  %872 = vdwg.mxu0
  %v873 = vmax.f32 %v844, %v859
  %v874 = vmax.f32 %v846, %v861
  %v875 = vmax.f32 %v849, %v864
  %v876 = vmax.f32 %v851, %v866
  %v877 = vmax.f32 %v854, %v869
  %v878 = vmax.f32 %v856, %v871
  %v879 = vld [vmem:[%s6] sm:$0xff]
  %v880 = vld [vmem:[%s6 + $0x8] sm:$0xff]
  %v881 = vld [vmem:[%s6 + $0x10] sm:$0xff]
  %v882 = vld [vmem:[%s6 + $0x18] sm:$0xff]
  %v883 = vld [vmem:[%s6 + $0x20] sm:$0xff]
  %v884 = vld [vmem:[%s6 + $0x28] sm:$0xff]
  %886 = vset.pattern.permute.xlu0 0
  %887 = vperm.xlu0 %886, %v879
  %v888 = vpop.permute.xlu0 %887
  %891 = vset.pattern.permute.xlu0 0
  %892 = vperm.xlu0 %891, %v880
  %v893 = vpop.permute.xlu0 %892
  %896 = vset.pattern.permute.xlu0 0
  %897 = vperm.xlu0 %896, %v881
  %v898 = vpop.permute.xlu0 %897
  %901 = vset.pattern.permute.xlu0 0
  %902 = vperm.xlu0 %901, %v882
  %v903 = vpop.permute.xlu0 %902
  %906 = vset.pattern.permute.xlu0 0
  %907 = vperm.xlu0 %906, %v883
  %v908 = vpop.permute.xlu0 %907
  %911 = vset.pattern.permute.xlu0 0
  %912 = vperm.xlu0 %911, %v884
  %v913 = vpop.permute.xlu0 %912
  %v915 = vadd.f32 %v873, %v888
  %v916 = vadd.f32 %v874, %v893
  %v917 = vadd.f32 %v875, %v898
  %v918 = vadd.f32 %v876, %v903
  %v919 = vadd.f32 %v877, %v908
  %v920 = vadd.f32 %v878, %v913
  %v921 = vmax.f32 %v915, 0.0
  %v922 = vmax.f32 %v916, 0.0
  %v923 = vmax.f32 %v917, 0.0
  %v924 = vmax.f32 %v918, 0.0
  %v925 = vmax.f32 %v919, 0.0
  %v926 = vmax.f32 %v920, 0.0
  %v927 = vld [vmem:[%s7] sm:$0xf]
  %v928 = vld [vmem:[%s7 + $0x4] sm:$0xf]
  %v929 = vld [vmem:[%s7 + $0x8] sm:$0xf]
  %v930 = vld [vmem:[%s7 + $0xc] sm:$0xf]
  %v931 = vpack.c.bf16 %v922, %v921
  %v932 = vpack.c.bf16 %v924, %v923
  %v933 = vpack.c.bf16 %v926, %v925
  %v934 = vld [vmem:[%s8] sm:$0xff]
  %v935 = vld [vmem:[%s8 + $0x8] sm:$0xff]
  %v936 = vld [vmem:[%s8 + $0x10] sm:$0xff]
  %v937 = vld [vmem:[%s8 + $0x18] sm:$0xff]
  %939 = vset.pattern.permute.xlu0 0
  %940 = vperm.xlu0 %939, %v934
  %v941 = vpop.permute.xlu0 %940
  %944 = vset.pattern.permute.xlu0 0
  %945 = vperm.xlu0 %944, %v935
  %v946 = vpop.permute.xlu0 %945
  %949 = vset.pattern.permute.xlu0 0
  %950 = vperm.xlu0 %949, %v936
  %v951 = vpop.permute.xlu0 %950
  %954 = vset.pattern.permute.xlu0 0
  %955 = vperm.xlu0 %954, %v937
  %v956 = vpop.permute.xlu0 %955
  %v962 = vunpack.c.l.b16 %v927
  %v963 = vunpack.c.l.b16 %v928
  %v964 = vunpack.c.l.b16 %v929
  %v965 = vunpack.c.l.b16 %v930
  %v966 = vpack.c.b16 %v963, %v962
  %v967 = vpack.c.b16 %v965, %v964
  %vm968 = vcmask 392192
  %v970 = vsel %vm968, %v966, 0
  %v973 = vsel %vm968, %v967, 0
  %975 = vmatpush.bf16.msra.mxu0 0
  %976 = vmatpush.bf16.msra.mxu0 0
  %977 = vmatpush.bf16.msra.mxu0 0
  %978 = vmatpush.bf16.msra.mxu0 0
  %979 = vmatpush.bf16.msra.mxu0 0
  %980 = vmatpush.bf16.msra.mxu0 %v933
  %981 = vmatpush.bf16.msra.mxu0 %v932
  %982 = vmatpush.bf16.msra.mxu0 %v931
  %983 = vmatmul.bf16.gmra.mxu0 %v970
  %v984 = vpop.f32.mrf.mxu0
  %v985 = vadd.f32 %v941, %v984
  %v986 = vpop.f32.mrf.mxu0
  %v987 = vadd.f32 %v946, %v986
  %988 = vmatmul.bf16.gmra.mxu0 %v973
  %v989 = vpop.f32.mrf.mxu0
  %v990 = vadd.f32 %v951, %v989
  %v991 = vpop.f32.mrf.mxu0
  %v992 = vadd.f32 %v956, %v991
  %993 = vdwg.mxu0
  %v994 = vmax.f32 %v985, 0.0
  %v995 = vmax.f32 %v987, 0.0
  %v996 = vmax.f32 %v990, 0.0
  %v997 = vmax.f32 %v992, 0.0
  %v998 = vld [vmem:[%s9] sm:$0xf]
  %v999 = vld [vmem:[%s9 + $0x4] sm:$0xf]
  %v1000 = vpack.c.bf16 %v995, %v994
  %v1001 = vpack.c.bf16 %v997, %v996
  %v1002 = vld [vmem:[%s10] sm:$0xff]
  %v1003 = vld [vmem:[%s10 + $0x8] sm:$0xff]
  %1005 = vset.pattern.permute.xlu0 0
  %1006 = vperm.xlu0 %1005, %v1002
  %v1007 = vpop.permute.xlu0 %1006
  %1010 = vset.pattern.permute.xlu0 0
  %1011 = vperm.xlu0 %1010, %v1003
  %v1012 = vpop.permute.xlu0 %1011
  %v1016 = vunpack.c.l.b16 %v998
  %v1017 = vunpack.c.l.b16 %v999
  %v1018 = vpack.c.b16 %v1017, %v1016
  %vm1019 = vcmask 261120
  %v1021 = vsel %vm1019, %v1018, 0
  %1023 = vmatpush.bf16.msra.mxu0 0
  %1024 = vmatpush.bf16.msra.mxu0 0
  %1025 = vmatpush.bf16.msra.mxu0 0
  %1026 = vmatpush.bf16.msra.mxu0 0
  %1027 = vmatpush.bf16.msra.mxu0 0
  %1028 = vmatpush.bf16.msra.mxu0 0
  %1029 = vmatpush.bf16.msra.mxu0 %v1001
  %1030 = vmatpush.bf16.msra.mxu0 %v1000
  %1031 = vmatmul.bf16.gmra.mxu0 %v1021
  %v1032 = vpop.f32.mrf.mxu0
  %v1033 = vadd.f32 %v1007, %v1032
  %v1034 = vpop.f32.mrf.mxu0
  %v1035 = vadd.f32 %v1012, %v1034
  %1036 = vdwg.mxu0
  %v1037 = vmax.f32 %v1033, 0.0
  %v1038 = vmax.f32 %v1035, 0.0
  %v1039 = vld [vmem:[%s11] sm:$0x3]
  %v1040 = vpack.c.bf16 %v1038, %v1037
  %v1041 = vld [vmem:[%s12] sm:$0x7]
  %1043 = vset.pattern.permute.xlu0 0
  %1044 = vperm.xlu0 %1043, %v1041
  %v1045 = vpop.permute.xlu0 %1044
  %vm1047 = vcmask 130048
  %v1049 = vsel %vm1047, %v1039, 0
  %1051 = vmatpush.bf16.msra.mxu0 0
  %1052 = vmatpush.bf16.msra.mxu0 0
  %1053 = vmatpush.bf16.msra.mxu0 0
  %1054 = vmatpush.bf16.msra.mxu0 0
  %1055 = vmatpush.bf16.msra.mxu0 0
  %1056 = vmatpush.bf16.msra.mxu0 0
  %1057 = vmatpush.bf16.msra.mxu0 0
  %1058 = vmatpush.bf16.msra.mxu0 %v1040
  %1059 = vmatmul.bf16.gmra.mxu0 %v1049
  %v1060 = vpop.f32.mrf.mxu0
  %v1061 = vadd.f32 %v1045, %v1060
  %v1062 = vpop.f32.mrf.mxu0
  %1063 = vdwg.mxu0
  %1064 = vst [vmem:[%s13] sm:$0x7] %v1061
  // Predicated region
  $region54: #{convolutional_network_forward.1} parent=0 // pred_check
    _
  $region55: #{convolutional_network_forward.1} parent=0 // pred_check_branch
    %1066 = sbr.rel (0) target = $region57
  $region56: #{convolutional_network_forward.1} parent=0 // pred_region
    _
  $region57: #{convolutional_network_forward.1} parent=0 // pred_fallthru
    _
  // Predicated region
  $region58: #{convolutional_network_forward.1} parent=0 // pred_check
    _
  $region59: #{convolutional_network_forward.1} parent=0 // pred_check_branch
    %1068 = sbr.rel (0) target = $region61
  $region60: #{convolutional_network_forward.1} parent=0 // pred_region
    _
  $region61: #{convolutional_network_forward.1} parent=0 // pred_fallthru
    _

</llo_original>
